<compile_context>
chip_gen: v7x
topology: tpu7x:2x2x1
jax: 0.10.0
libtpu: 0.0.40
codegen_flags: <defaults>
</compile_context>

<pallas_src>
import functools
import math

import jax
import jax.numpy as jnp
from jax.experimental import pallas as pl
from jax.experimental.pallas import tpu as pltpu


# ---------------------------------------------------------------------------
# small helpers
# ---------------------------------------------------------------------------

def _round_up(x, m):
    return (x + m - 1) // m * m


def _ln(x, g, b, eps):
    """LayerNorm over the last dim, f32 math. x:(R,D), g/b:(1,D)."""
    mu = jnp.mean(x, axis=-1, keepdims=True)
    xc = x - mu
    var = jnp.mean(xc * xc, axis=-1, keepdims=True)
    return xc * jax.lax.rsqrt(var + eps) * g + b


# ---------------------------------------------------------------------------
# Stem kernel: patchify matmul -> patch_embed -> [cls | tokens | 0-pad] + pos
# ---------------------------------------------------------------------------

def _stem_kernel(p_ref, bw_ref, bb_ref, pw_ref, pb_ref, cls_ref, pos_ref, o_ref,
                 *, batch, n_patches, t_pad):
    # One grid step over the whole flattened batch: M = B*Np rows for the MXU.
    feat = jnp.dot(p_ref[...], bw_ref[...],
                   preferred_element_type=jnp.float32) + bb_ref[...]       # (B*Np, F) f32
    tok = jnp.dot(feat, pw_ref[...].astype(jnp.float32),
                  preferred_element_type=jnp.float32) + pb_ref[...]        # (B*Np, dim) f32
    dim = tok.shape[-1]
    n_pad = t_pad - 1 - n_patches
    for b in range(batch):                                                 # static unroll
        parts = [cls_ref[...], tok[b * n_patches:(b + 1) * n_patches, :]]
        if n_pad > 0:
            parts.append(jnp.zeros((n_pad, dim), jnp.float32))
        o_ref[b] = jnp.concatenate(parts, axis=0) + pos_ref[...]           # (T_pad, dim)


def vtr_stem(patches, params, *, t_pad, n_patches, batch):
    dim = params["patch_embed_w"].shape[1]
    kernel = functools.partial(_stem_kernel, batch=batch,
                               n_patches=n_patches, t_pad=t_pad)

    def full(a):
        return pl.BlockSpec(a.shape, lambda i: (0,) * a.ndim)

    return pl.pallas_call(
        kernel,
        out_shape=jax.ShapeDtypeStruct((batch, t_pad, dim), jnp.float32),
        grid=(1,),
        in_specs=[full(patches),
                  full(params["backbone_w"]), full(params["backbone_b"]),
                  full(params["patch_embed_w"]), full(params["patch_embed_b"]),
                  full(params["cls_token"]), full(params["pos_embed"])],
        out_specs=pl.BlockSpec((batch, t_pad, dim), lambda i: (0, 0, 0)),
    )(patches, params["backbone_w"], params["backbone_b"],
      params["patch_embed_w"], params["patch_embed_b"],
      params["cls_token"], params["pos_embed"])


# ---------------------------------------------------------------------------
# Fused transformer (all blocks) + final norm + classifier
# ---------------------------------------------------------------------------

def _transformer_head_kernel(
        x_ref, ln1g_ref, ln1b_ref, qkvw_ref, qkvb_ref, projw_ref, projb_ref,
        ln2g_ref, ln2b_ref, fc1w_ref, fc1b_ref, fc2w_ref, fc2b_ref,
        ng_ref, nb_ref, fcw_ref, fcb_ref, o_ref, acc_ref,
        *, num_heads, head_dim, t_real, eps):
    d = pl.program_id(1)

    @pl.when(d == 0)
    def _():
        acc_ref[...] = x_ref[0]                                  # residual stays f32

    x = acc_ref[...]                                             # (T_pad, dim) f32
    t_pad, dim = x.shape

    # --- attention branch: x = x + proj(MHA(LN1(x))) ---
    h = _ln(x, ln1g_ref[0], ln1b_ref[0], eps)
    qkv = jnp.dot(h.astype(jnp.bfloat16), qkvw_ref[0],
                  preferred_element_type=jnp.float32) + qkvb_ref[0]   # (T_pad, 3*dim) f32

    scale = 1.0 / math.sqrt(head_dim)
    # mask padded key columns (rows >= t_real are zero-pad tokens)
    key_bias = jnp.where(
        jax.lax.broadcasted_iota(jnp.int32, (1, t_pad), 1) < t_real, 0.0, -1e30)

    pw = projw_ref[0]                                            # (dim, dim) bf16
    attn = jnp.zeros((t_pad, dim), jnp.float32)
    for i in range(num_heads):                                   # static unroll
        lo = i * head_dim
        qh = qkv[:, lo:lo + head_dim]
        kh = qkv[:, dim + lo:dim + lo + head_dim]
        vh = qkv[:, 2 * dim + lo:2 * dim + lo + head_dim]
        s = jax.lax.dot_general(qh, kh, (((1,), (1,)), ((), ())),
                                preferred_element_type=jnp.float32) * scale
        s = s + key_bias
        s = s - jnp.max(s, axis=-1, keepdims=True)
        p = jnp.exp(s)
        p = p * pl.reciprocal(jnp.sum(p, axis=-1, keepdims=True), approx=True)
        oh = jnp.dot(p, vh, preferred_element_type=jnp.float32)          # (T_pad, hd)
        # accumulate head output straight through its slice of proj (no lane concat)
        attn = attn + jnp.dot(oh.astype(jnp.bfloat16), pw[lo:lo + head_dim, :],
                              preferred_element_type=jnp.float32)
    x = x + attn + projb_ref[0]

    # --- MLP branch: x = x + fc2(GELU(fc1(LN2(x)))) ---
    h = _ln(x, ln2g_ref[0], ln2b_ref[0], eps)
    h = jnp.dot(h.astype(jnp.bfloat16), fc1w_ref[0],
                preferred_element_type=jnp.float32) + fc1b_ref[0]
    h = jax.nn.gelu(h, approximate=True)
    x = x + jnp.dot(h.astype(jnp.bfloat16), fc2w_ref[0],
                    preferred_element_type=jnp.float32) + fc2b_ref[0]

    acc_ref[...] = x

    # --- after the last block: final LayerNorm on cls token + classifier ---
    @pl.when(d == pl.num_programs(1) - 1)
    def _():
        cls = x[0:1, :]                                          # (1, dim) f32
        xn = _ln(cls, ng_ref[...], nb_ref[...], eps)
        logits = jnp.dot(xn.astype(jnp.bfloat16), fcw_ref[...],
                         preferred_element_type=jnp.float32) + fcb_ref[...]
        o_ref[0] = logits                                        # (1, NC_pad) lane-dense


_STACKED = ("ln1_g", "ln1_b", "qkv_w", "qkv_b", "proj_w", "proj_b",
            "ln2_g", "ln2_b", "fc1_w", "fc1_b", "fc2_w", "fc2_b")
_HEAD = ("norm_g", "norm_b", "fc_w", "fc_b")


def vtr_transformer_head(x, params, *, num_heads, t_real):
    B, t_pad, dim = x.shape
    depth = params["qkv_w"].shape[0]
    nc_pad = params["fc_w"].shape[1]
    head_dim = dim // num_heads
    kernel = functools.partial(_transformer_head_kernel, num_heads=num_heads,
                               head_dim=head_dim, t_real=t_real, eps=1e-6)

    def stacked_spec(a):   # per-layer weight, selected by the depth grid index
        return pl.BlockSpec((1,) + a.shape[1:],
                            lambda b, d: (d,) + (0,) * (a.ndim - 1))

    def shared_spec(a):    # head weights, shared across the grid
        return pl.BlockSpec(a.shape, lambda b, d: (0,) * a.ndim)

    logits = pl.pallas_call(
        kernel,
        out_shape=jax.ShapeDtypeStruct((B, 1, nc_pad), jnp.float32),
        grid=(B, depth),
        in_specs=[pl.BlockSpec((1, t_pad, dim), lambda b, d: (b, 0, 0))]
                 + [stacked_spec(params[k]) for k in _STACKED]
                 + [shared_spec(params[k]) for k in _HEAD],
        out_specs=pl.BlockSpec((1, 1, nc_pad), lambda b, d: (b, 0, 0)),
        scratch_shapes=[pltpu.VMEM((t_pad, dim), jnp.float32)],   # f32 residual stream
        compiler_params=pltpu.CompilerParams(
            dimension_semantics=("parallel", "arbitrary")),
    )(x, *[params[k] for k in _STACKED], *[params[k] for k in _HEAD])
    return logits[:, 0, :params["num_classes"]]


# ---------------------------------------------------------------------------
# Parameters (deterministic, synthetic)
# ---------------------------------------------------------------------------

def init_params(key, *, in_chans, patch, feature_dim, dim, depth, num_heads,
                mlp_hidden, num_classes, num_patches):
    t = num_patches + 1
    t_pad = _round_up(t, 16)                  # bf16 sublane packing -> multiple of 16
    nc_pad = _round_up(num_classes, 128)      # lane-dense classifier output
    keys = jax.random.split(key, 10)

    def w(k, shape, scale=0.02, dtype=jnp.bfloat16):
        return (scale * jax.random.normal(k, shape)).astype(dtype)

    pos = w(keys[3], (t, dim), dtype=jnp.float32)
    pos = jnp.concatenate([pos, jnp.zeros((t_pad - t, dim), jnp.float32)], axis=0)

    params = {
        "patch": patch, "num_heads": num_heads, "num_classes": num_classes,
        "t_pad": t_pad,
        # synthetic backbone (patchify conv): (C*P*P, feature_dim)
        "backbone_w": w(keys[0], (in_chans * patch * patch, feature_dim)),
        "backbone_b": jnp.zeros((1, feature_dim), jnp.float32),
        # patch_embed = nn.Conv2d(feature_dim, dim, 1)
        "patch_embed_w": w(keys[1], (feature_dim, dim)),
        "patch_embed_b": jnp.zeros((1, dim), jnp.float32),
        "cls_token": w(keys[2], (1, dim), dtype=jnp.float32),
        "pos_embed": pos,                                    # (t_pad, dim), pad rows zero
        # depth-stacked transformer weights (one fused pallas_call over the depth axis)
        "ln1_g": jnp.ones((depth, 1, dim), jnp.float32),
        "ln1_b": jnp.zeros((depth, 1, dim), jnp.float32),
        "qkv_w": w(keys[6], (depth, dim, 3 * dim)),
        "qkv_b": jnp.zeros((depth, 1, 3 * dim), jnp.float32),
        "proj_w": w(keys[7], (depth, dim, dim)),
        "proj_b": jnp.zeros((depth, 1, dim), jnp.float32),
        "ln2_g": jnp.ones((depth, 1, dim), jnp.float32),
        "ln2_b": jnp.zeros((depth, 1, dim), jnp.float32),
        "fc1_w": w(keys[8], (depth, dim, mlp_hidden)),
        "fc1_b": jnp.zeros((depth, 1, mlp_hidden), jnp.float32),
        "fc2_w": w(keys[9], (depth, mlp_hidden, dim)),
        "fc2_b": jnp.zeros((depth, 1, dim), jnp.float32),
        # final norm + classifier (lane-padded)
        "norm_g": jnp.ones((1, dim), jnp.float32),
        "norm_b": jnp.zeros((1, dim), jnp.float32),
        "fc_w": w(keys[4], (dim, nc_pad)),
        "fc_b": jnp.zeros((1, nc_pad), jnp.float32),
    }
    return params


# ---------------------------------------------------------------------------
# Forward pass (mirrors VTR.forward)
# ---------------------------------------------------------------------------

def vtr_forward(x_nchw, params):
    B, C, H, W = x_nchw.shape
    P = params["patch"]
    Hp, Wp = H // P, W // P
    Np = Hp * Wp
    T = Np + 1

    # backbone patchify (synthetic, see TODO above); layout-only transpose in XLA
    patches = x_nchw.reshape(B, C, Hp, P, Wp, P).transpose(0, 2, 4, 1, 3, 5)
    patches = patches.reshape(B * Np, C * P * P).astype(jnp.bfloat16)

    # fused stem: backbone matmul + patch_embed + cls + pos_embed (emb_dropout = id)
    x = vtr_stem(patches, params, t_pad=params["t_pad"], n_patches=Np, batch=B)

    # one fused kernel: all transformer blocks + final norm + classification head
    return vtr_transformer_head(x, params, num_heads=params["num_heads"], t_real=T)


# ---------------------------------------------------------------------------
# Main
# ---------------------------------------------------------------------------

if __name__ == "__main__":
    B, in_chans, img_size = 2, 3, 32
    patch, feature_dim = 8, 64          # synthetic backbone -> 4x4 x 64 feature map
    dim, depth, num_heads = 128, 2, 4   # dim=128 keeps the slab lane-dense
    mlp_hidden, num_classes = 256, 10
    num_patches = (img_size // patch) ** 2

    key = jax.random.PRNGKey(0)
    kx, kp = jax.random.split(key)
    x = jax.random.normal(kx, (B, in_chans, img_size, img_size), jnp.float32)
    params = init_params(
        kp, in_chans=in_chans, patch=patch, feature_dim=feature_dim, dim=dim,
        depth=depth, num_heads=num_heads, mlp_hidden=mlp_hidden,
        num_classes=num_classes, num_patches=num_patches)

    logits = vtr_forward(x, params)
    jax.block_until_ready(logits)
    assert logits.shape == (B, num_classes), logits.shape
    assert bool(jnp.all(jnp.isfinite(logits)))
    print("KERNEL_OK")
</pallas_src>

<mosaic_0001>
module attributes {stable_mosaic.version = 11 : i64} {
  func.func @_stem_kernel(%arg0: i32, %arg1: memref<32x192xbf16, #tpu.memory_space<vmem>>, %arg2: memref<192x64xbf16, #tpu.memory_space<vmem>>, %arg3: memref<1x64xf32, #tpu.memory_space<vmem>>, %arg4: memref<64x128xbf16, #tpu.memory_space<vmem>>, %arg5: memref<1x128xf32, #tpu.memory_space<vmem>>, %arg6: memref<1x128xf32, #tpu.memory_space<vmem>>, %arg7: memref<32x128xf32, #tpu.memory_space<vmem>>, %arg8: memref<2x32x128xf32, #tpu.memory_space<vmem>>) attributes {dimension_semantics = [#tpu.dimension_semantics<arbitrary>], iteration_bounds = array<i64: 1>, scalar_prefetch = 0 : i64, scratch_operands = 0 : i64, tpu.core_type = #tpu.core_type<tc>, window_params = [{pipeline_mode = #tpu.pipeline_mode<synchronous>, transform_indices = @transform_0, window_bounds = array<i64: 32, 192>}, {pipeline_mode = #tpu.pipeline_mode<synchronous>, transform_indices = @transform_1, window_bounds = array<i64: 192, 64>}, {pipeline_mode = #tpu.pipeline_mode<synchronous>, transform_indices = @transform_2, window_bounds = array<i64: 1, 64>}, {pipeline_mode = #tpu.pipeline_mode<synchronous>, transform_indices = @transform_3, window_bounds = array<i64: 64, 128>}, {pipeline_mode = #tpu.pipeline_mode<synchronous>, transform_indices = @transform_4, window_bounds = array<i64: 1, 128>}, {pipeline_mode = #tpu.pipeline_mode<synchronous>, transform_indices = @transform_5, window_bounds = array<i64: 1, 128>}, {pipeline_mode = #tpu.pipeline_mode<synchronous>, transform_indices = @transform_6, window_bounds = array<i64: 32, 128>}, {pipeline_mode = #tpu.pipeline_mode<synchronous>, transform_indices = @transform_7, window_bounds = array<i64: 2, 32, 128>}]} {
    %c0 = arith.constant 0 : index
    %c0_0 = arith.constant 0 : index
    %0 = vector.load %arg1[%c0, %c0_0] : memref<32x192xbf16, #tpu.memory_space<vmem>>, vector<32x192xbf16>
    %c0_1 = arith.constant 0 : index
    %c0_2 = arith.constant 0 : index
    %1 = vector.load %arg2[%c0_1, %c0_2] : memref<192x64xbf16, #tpu.memory_space<vmem>>, vector<192x64xbf16>
    %cst = arith.constant dense<0.000000e+00> : vector<32x64xf32>
    %2 = tpu.matmul %0, %1, %cst {dimension_numbers = #tpu.dot_dimension_numbers<[1], [0], [0], [1], [0, 0, 1, 1], [], []>} : vector<32x192xbf16>, vector<192x64xbf16>, vector<32x64xf32> -> vector<32x64xf32>
    %c0_3 = arith.constant 0 : index
    %c0_4 = arith.constant 0 : index
    %3 = vector.load %arg3[%c0_3, %c0_4] : memref<1x64xf32, #tpu.memory_space<vmem>>, vector<1x64xf32>
    %4 = vector.broadcast %3 : vector<1x64xf32> to vector<32x64xf32>
    %5 = arith.addf %2, %4 : vector<32x64xf32>
    %c0_5 = arith.constant 0 : index
    %c0_6 = arith.constant 0 : index
    %6 = vector.load %arg4[%c0_5, %c0_6] : memref<64x128xbf16, #tpu.memory_space<vmem>>, vector<64x128xbf16>
    %7 = arith.extf %6 : vector<64x128xbf16> to vector<64x128xf32>
    %cst_7 = arith.constant dense<0.000000e+00> : vector<32x128xf32>
    %8 = tpu.matmul %5, %7, %cst_7 {dimension_numbers = #tpu.dot_dimension_numbers<[1], [0], [0], [1], [0, 0, 1, 1], [], []>} : vector<32x64xf32>, vector<64x128xf32>, vector<32x128xf32> -> vector<32x128xf32>
    %c0_8 = arith.constant 0 : index
    %c0_9 = arith.constant 0 : index
    %9 = vector.load %arg5[%c0_8, %c0_9] : memref<1x128xf32, #tpu.memory_space<vmem>>, vector<1x128xf32>
    %10 = vector.broadcast %9 : vector<1x128xf32> to vector<32x128xf32>
    %11 = arith.addf %8, %10 : vector<32x128xf32>
    %c0_10 = arith.constant 0 : index
    %c0_11 = arith.constant 0 : index
    %12 = vector.load %arg6[%c0_10, %c0_11] : memref<1x128xf32, #tpu.memory_space<vmem>>, vector<1x128xf32>
    %13 = vector.extract_strided_slice %11 {offsets = [0, 0], sizes = [16, 128], strides = [1, 1]} : vector<32x128xf32> to vector<16x128xf32>
    %cst_12 = arith.constant 0.000000e+00 : f32
    %14 = vector.broadcast %cst_12 : f32 to vector<15x128xf32>
    %15 = tpu.concatenate %12, %13, %14 in 0 : vector<1x128xf32>, vector<16x128xf32>, vector<15x128xf32> -> vector<32x128xf32>
    %c0_13 = arith.constant 0 : index
    %c0_14 = arith.constant 0 : index
    %16 = vector.load %arg7[%c0_13, %c0_14] : memref<32x128xf32, #tpu.memory_space<vmem>>, vector<32x128xf32>
    %17 = arith.addf %15, %16 : vector<32x128xf32>
    %c0_15 = arith.constant 0 : index
    %c0_16 = arith.constant 0 : index
    %c0_17 = arith.constant 0 : index
    %18 = vector.load %arg8[%c0_15, %c0_16, %c0_17] : memref<2x32x128xf32, #tpu.memory_space<vmem>>, vector<1x32x128xf32>
    %19 = vector.shape_cast %18 : vector<1x32x128xf32> to vector<32x128xf32>
    %20 = vector.shape_cast %17 : vector<32x128xf32> to vector<1x32x128xf32>
    tpu.vector_store %arg8[%c0_15, %c0_16, %c0_17], %20 {strides = array<i32>} : memref<2x32x128xf32, #tpu.memory_space<vmem>>, vector<1x32x128xf32>,
    %c0_18 = arith.constant 0 : index
    %c0_19 = arith.constant 0 : index
    %21 = vector.load %arg6[%c0_18, %c0_19] : memref<1x128xf32, #tpu.memory_space<vmem>>, vector<1x128xf32>
    %22 = vector.extract_strided_slice %11 {offsets = [16, 0], sizes = [16, 128], strides = [1, 1]} : vector<32x128xf32> to vector<16x128xf32>
    %cst_20 = arith.constant 0.000000e+00 : f32
    %23 = vector.broadcast %cst_20 : f32 to vector<15x128xf32>
    %24 = tpu.concatenate %21, %22, %23 in 0 : vector<1x128xf32>, vector<16x128xf32>, vector<15x128xf32> -> vector<32x128xf32>
    %c0_21 = arith.constant 0 : index
    %c0_22 = arith.constant 0 : index
    %25 = vector.load %arg7[%c0_21, %c0_22] : memref<32x128xf32, #tpu.memory_space<vmem>>, vector<32x128xf32>
    %26 = arith.addf %24, %25 : vector<32x128xf32>
    %c1 = arith.constant 1 : index
    %c0_23 = arith.constant 0 : index
    %c0_24 = arith.constant 0 : index
    %27 = vector.load %arg8[%c1, %c0_23, %c0_24] : memref<2x32x128xf32, #tpu.memory_space<vmem>>, vector<1x32x128xf32>
    %28 = vector.shape_cast %27 : vector<1x32x128xf32> to vector<32x128xf32>
    %29 = vector.shape_cast %26 : vector<32x128xf32> to vector<1x32x128xf32>
    tpu.vector_store %arg8[%c1, %c0_23, %c0_24], %29 {strides = array<i32>} : memref<2x32x128xf32, #tpu.memory_space<vmem>>, vector<1x32x128xf32>,
    return
  }
  func.func @transform_0(%arg0: i32) -> (i32, i32) {
    %c0_i32 = arith.constant 0 : i32
    %c0_i32_0 = arith.constant 0 : i32
    %c0_i32_1 = arith.constant 0 : i32
    return %c0_i32, %c0_i32_0 : i32, i32
  }
  func.func @transform_1(%arg0: i32) -> (i32, i32) {
    %c0_i32 = arith.constant 0 : i32
    %c0_i32_0 = arith.constant 0 : i32
    %c0_i32_1 = arith.constant 0 : i32
    return %c0_i32, %c0_i32_0 : i32, i32
  }
  func.func @transform_2(%arg0: i32) -> (i32, i32) {
    %c0_i32 = arith.constant 0 : i32
    %c0_i32_0 = arith.constant 0 : i32
    %c0_i32_1 = arith.constant 0 : i32
    return %c0_i32, %c0_i32_0 : i32, i32
  }
  func.func @transform_3(%arg0: i32) -> (i32, i32) {
    %c0_i32 = arith.constant 0 : i32
    %c0_i32_0 = arith.constant 0 : i32
    %c0_i32_1 = arith.constant 0 : i32
    return %c0_i32, %c0_i32_0 : i32, i32
  }
  func.func @transform_4(%arg0: i32) -> (i32, i32) {
    %c0_i32 = arith.constant 0 : i32
    %c0_i32_0 = arith.constant 0 : i32
    %c0_i32_1 = arith.constant 0 : i32
    return %c0_i32, %c0_i32_0 : i32, i32
  }
  func.func @transform_5(%arg0: i32) -> (i32, i32) {
    %c0_i32 = arith.constant 0 : i32
    %c0_i32_0 = arith.constant 0 : i32
    %c0_i32_1 = arith.constant 0 : i32
    return %c0_i32, %c0_i32_0 : i32, i32
  }
  func.func @transform_6(%arg0: i32) -> (i32, i32) {
    %c0_i32 = arith.constant 0 : i32
    %c0_i32_0 = arith.constant 0 : i32
    %c0_i32_1 = arith.constant 0 : i32
    return %c0_i32, %c0_i32_0 : i32, i32
  }
  func.func @transform_7(%arg0: i32) -> (i32, i32, i32) {
    %c0_i32 = arith.constant 0 : i32
    %c0_i32_0 = arith.constant 0 : i32
    %c0_i32_1 = arith.constant 0 : i32
    %c0_i32_2 = arith.constant 0 : i32
    return %c0_i32, %c0_i32_0, %c0_i32_1 : i32, i32, i32
  }
}

</mosaic_0001>

<llo_original>
// kernel: tpu_custom_call.1
$region0: #{tpu_custom_call.1}
  #allocation0 [shape = 'u32[]', space=smem, size = 0x4, offset = 0x4, fixed_abs, tag = 'smem constant byte address 0x4 - core index']
  #allocation1 [shape = 'u32[144,128]{1,0:T(1,128)}', space=vmem, size = 0x12000, scoped, tag = 'internal scratch']
  %s0 = inlined_call_operand.vmem [shape: bf16[32,192], index: 0, kind: input, shape index: {}]
  %s1 = inlined_call_operand.vmem [shape: bf16[192,64], index: 1, kind: input, shape index: {}]
  %s2 = inlined_call_operand.vmem [shape: f32[1,64], index: 2, kind: input, shape index: {}]
  %s3 = inlined_call_operand.vmem [shape: bf16[64,128], index: 3, kind: input, shape index: {}]
  %s4 = inlined_call_operand.vmem [shape: f32[1,128], index: 4, kind: input, shape index: {}]
  %s5 = inlined_call_operand.vmem [shape: f32[1,128], index: 5, kind: input, shape index: {}]
  %s6 = inlined_call_operand.vmem [shape: f32[32,128], index: 6, kind: input, shape index: {}]
  %s7 = inlined_call_operand.hbm [shape: f32[2,32,128], index: 7, kind: output, shape index: {}]
  %s8 = sld [smem:[#allocation0]]
  $region38: #{tpu_custom_call.1} parent=0
    _
  %s10 = ssub.s32 1, %s8
  %s11 = scalar_select 0, %s10, %s8
  $region1: #{tpu_custom_call.1} parent=0
    #allocation2 [shape = 'u8[32768]{0}', space=vmem, size = 0x8000, scoped, tag = 'output window, operand 0, single buffered']
    #allocation3 [shape = 's32[1]{0}', space=sflag, size = 0x4, scoped, tag = 'scoped memory for tpu_custom_call.1']
    %12 = vsyncpa [#allocation3], 0
    // Predicated region
    $region2: #{tpu_custom_call.1} parent=1 // pred_check
      _
    $region3: #{tpu_custom_call.1} parent=1 // pred_check_branch
      %14 = sbr.rel (0) target = $region5
    $region4: #{tpu_custom_call.1} parent=1 // pred_region
      _
    $region5: #{tpu_custom_call.1} parent=1 // pred_fallthru
      _
    // Predicated region
    $region6: #{tpu_custom_call.1} parent=1 // pred_check
      _
    $region7: #{tpu_custom_call.1} parent=1 // pred_check_branch
      %16 = sbr.rel (0) target = $region9
    $region8: #{tpu_custom_call.1} parent=1 // pred_region
      _
    $region9: #{tpu_custom_call.1} parent=1 // pred_fallthru
      _
    // Predicated region
    $region10: #{tpu_custom_call.1} parent=1 // pred_check
      _
    $region11: #{tpu_custom_call.1} parent=1 // pred_check_branch
      %18 = sbr.rel (0) target = $region13
    $region12: #{tpu_custom_call.1} parent=1 // pred_region
      _
    $region13: #{tpu_custom_call.1} parent=1 // pred_fallthru
      _
    // Predicated region
    $region14: #{tpu_custom_call.1} parent=1 // pred_check
      _
    $region15: #{tpu_custom_call.1} parent=1 // pred_check_branch
      %20 = sbr.rel (0) target = $region17
    $region16: #{tpu_custom_call.1} parent=1 // pred_region
      _
    $region17: #{tpu_custom_call.1} parent=1 // pred_fallthru
      _
    // Predicated region
    $region18: #{tpu_custom_call.1} parent=1 // pred_check
      _
    $region19: #{tpu_custom_call.1} parent=1 // pred_check_branch
      %22 = sbr.rel (0) target = $region21
    $region20: #{tpu_custom_call.1} parent=1 // pred_region
      _
    $region21: #{tpu_custom_call.1} parent=1 // pred_fallthru
      _
    // Predicated region
    $region22: #{tpu_custom_call.1} parent=1 // pred_check
      _
    $region23: #{tpu_custom_call.1} parent=1 // pred_check_branch
      %24 = sbr.rel (0) target = $region25
    $region24: #{tpu_custom_call.1} parent=1 // pred_region
      _
    $region25: #{tpu_custom_call.1} parent=1 // pred_fallthru
      _
    // Predicated region
    $region26: #{tpu_custom_call.1} parent=1 // pred_check
      _
    $region27: #{tpu_custom_call.1} parent=1 // pred_check_branch
      %26 = sbr.rel (0) target = $region29
    $region28: #{tpu_custom_call.1} parent=1 // pred_region
      _
    $region29: #{tpu_custom_call.1} parent=1 // pred_fallthru
      _
    %v28 = vld [vmem:[%s0] sm:$0xff]
    %v29 = vld [vmem:[%s0 + $0x8] sm:$0xff]
    %v30 = vld [vmem:[%s0 + $0x10] sm:$0xff]
    %v31 = vld [vmem:[%s0 + $0x18] sm:$0xff]
    %v32 = vld [vmem:[%s1] sm:$0xf]
    %v33 = vld [vmem:[%s1 + $0x4] sm:$0xf]
    %v34 = vld [vmem:[%s1 + $0x8] sm:$0xf]
    %v35 = vld [vmem:[%s1 + $0xc] sm:$0xf]
    %v36 = vld [vmem:[%s1 + $0x10] sm:$0xf]
    %v37 = vld [vmem:[%s1 + $0x14] sm:$0xf]
    %v38 = vld [vmem:[%s1 + $0x18] sm:$0xf]
    %v39 = vld [vmem:[%s1 + $0x1c] sm:$0xf]
    %v40 = vld [vmem:[%s1 + $0x20] sm:$0xf]
    %v41 = vld [vmem:[%s1 + $0x24] sm:$0xf]
    %v42 = vld [vmem:[%s1 + $0x28] sm:$0xf]
    %v43 = vld [vmem:[%s1 + $0x2c] sm:$0xf]
    %v44 = vld [vmem:[%s1 + $0x30] sm:$0xf]
    %v45 = vld [vmem:[%s1 + $0x34] sm:$0xf]
    %v46 = vld [vmem:[%s1 + $0x38] sm:$0xf]
    %v47 = vld [vmem:[%s1 + $0x3c] sm:$0xf]
    %v48 = vld [vmem:[%s1 + $0x40] sm:$0xf]
    %v49 = vld [vmem:[%s1 + $0x44] sm:$0xf]
    %v50 = vld [vmem:[%s1 + $0x48] sm:$0xf]
    %v51 = vld [vmem:[%s1 + $0x4c] sm:$0xf]
    %v52 = vld [vmem:[%s1 + $0x50] sm:$0xf]
    %v53 = vld [vmem:[%s1 + $0x54] sm:$0xf]
    %v54 = vld [vmem:[%s1 + $0x58] sm:$0xf]
    %v55 = vld [vmem:[%s1 + $0x5c] sm:$0xf]
    %v56 = vld [vmem:[%s2] sm:$0x1]
    %v58 = vlaneseq
    %v59 = vshrl.u32 %v58, 7
    %v60 = vsub.s32 0, %v59
    %v61 = vrot.slane %v56, %v60
    %v67 = vunpack.c.l.b16 %v28
    %v68 = vunpack.c.h.b16 %v28
    %v69 = vunpack.c.l.b16 %v29
    %v70 = vunpack.c.h.b16 %v29
    %v71 = vunpack.c.l.b16 %v30
    %v72 = vunpack.c.h.b16 %v30
    %v73 = vunpack.c.l.b16 %v31
    %v74 = vunpack.c.h.b16 %v31
    %v75 = vpack.c.b16 %v69, %v67
    %v76 = vpack.c.b16 %v70, %v68
    %v77 = vpack.c.b16 %v73, %v71
    %v78 = vpack.c.b16 %v74, %v72
    %v105 = vunpack.c.l.b16 %v32
    %v106 = vunpack.c.l.b16 %v33
    %v107 = vunpack.c.l.b16 %v34
    %v108 = vunpack.c.l.b16 %v35
    %v109 = vunpack.c.l.b16 %v36
    %v110 = vunpack.c.l.b16 %v37
    %v111 = vunpack.c.l.b16 %v38
    %v112 = vunpack.c.l.b16 %v39
    %v113 = vunpack.c.l.b16 %v40
    %v114 = vunpack.c.l.b16 %v41
    %v115 = vunpack.c.l.b16 %v42
    %v116 = vunpack.c.l.b16 %v43
    %v117 = vunpack.c.l.b16 %v44
    %v118 = vunpack.c.l.b16 %v45
    %v119 = vunpack.c.l.b16 %v46
    %v120 = vunpack.c.l.b16 %v47
    %v121 = vunpack.c.l.b16 %v48
    %v122 = vunpack.c.l.b16 %v49
    %v123 = vunpack.c.l.b16 %v50
    %v124 = vunpack.c.l.b16 %v51
    %v125 = vunpack.c.l.b16 %v52
    %v126 = vunpack.c.l.b16 %v53
    %v127 = vunpack.c.l.b16 %v54
    %v128 = vunpack.c.l.b16 %v55
    %v129 = vpack.c.b16 %v106, %v105
    %v130 = vpack.c.b16 %v108, %v107
    %v131 = vpack.c.b16 %v110, %v109
    %v132 = vpack.c.b16 %v112, %v111
    %v133 = vpack.c.b16 %v114, %v113
    %v134 = vpack.c.b16 %v116, %v115
    %v135 = vpack.c.b16 %v118, %v117
    %v136 = vpack.c.b16 %v120, %v119
    %v137 = vpack.c.b16 %v122, %v121
    %v138 = vpack.c.b16 %v124, %v123
    %v139 = vpack.c.b16 %v126, %v125
    %v140 = vpack.c.b16 %v128, %v127
    %vm153 = vcmask 523264
    %v155 = vsel %vm153, %v76, 0
    %v158 = vsel %vm153, %v78, 0
    %160 = vmatprep.subr.bf16.mxu0 0
    %161 = vmatpush1.bf16.msra.mxu0 %v129
    %162 = vmatprep.subr.bf16.mxu0 0
    %163 = vmatpush1.bf16.msra.mxu0 %v130
    %164 = vmatprep.subr.bf16.mxu0 0
    %165 = vmatpush1.bf16.msra.mxu0 %v131
    %166 = vmatprep.subr.bf16.mxu0 0
    %167 = vmatpush1.bf16.msra.mxu0 %v132
    %168 = vmatprep.subr.bf16.mxu0 0
    %169 = vmatpush1.bf16.msra.mxu0 %v133
    %170 = vmatprep.subr.bf16.mxu0 0
    %171 = vmatpush1.bf16.msra.mxu0 %v134
    %172 = vmatprep.subr.bf16.mxu0 0
    %173 = vmatpush1.bf16.msra.mxu0 %v135
    %174 = vmatprep.subr.bf16.mxu0 0
    %175 = vmatpush1.bf16.msra.mxu0 %v136
    %176 = vmatprep.subr.bf16.mxu0 0
    %177 = vmatpush1.bf16.msra.mxu0 %v137
    %178 = vmatprep.subr.bf16.mxu0 0
    %179 = vmatpush1.bf16.msra.mxu0 %v138
    %180 = vmatprep.subr.bf16.mxu0 0
    %181 = vmatpush1.bf16.msra.mxu0 %v139
    %182 = vmatprep.subr.bf16.mxu0 0
    %183 = vmatpush1.bf16.msra.mxu0 %v140
    %184 = vmatprep.subr.bf16.mxu0 0
    %185 = vmatpush1.bf16.msra.mxu0 0
    %186 = vmatprep.subr.bf16.mxu0 0
    %187 = vmatpush1.bf16.msra.mxu0 0
    %188 = vmatprep.subr.bf16.mxu0 0
    %189 = vmatpush1.bf16.msra.mxu0 0
    %190 = vmatprep.subr.bf16.mxu0 0
    %191 = vmatpush1.bf16.msra.mxu0 0
    %192 = vmatprep.mubr.bf16.mxu0 %v155
    %193 = vmatmul.mubr.bf16.gmra.mrb[0].mxu0 %v75
    %v194 = vpop.f32.mrb[0].mxu0
    %v195 = vadd.f32 %v61, %v194
    %v196 = vpop.f32.mrb[0].mxu0
    %v197 = vpop.f32.mrb[0].mxu0
    %v198 = vadd.f32 %v61, %v197
    %v199 = vpop.f32.mrb[0].mxu0
    %200 = vmatprep.mubr.bf16.mxu0 %v158
    %201 = vmatmul.mubr.bf16.gmra.mrb[0].mxu0 %v77
    %v202 = vpop.f32.mrb[0].mxu0
    %v203 = vadd.f32 %v61, %v202
    %v204 = vpop.f32.mrb[0].mxu0
    %v205 = vpop.f32.mrb[0].mxu0
    %v206 = vadd.f32 %v61, %v205
    %v207 = vpop.f32.mrb[0].mxu0
    %208 = vdwg.mxu0
    %v209 = vld [vmem:[%s3] sm:$0xf]
    %v210 = vld [vmem:[%s3 + $0x4] sm:$0xf]
    %v211 = vld [vmem:[%s3 + $0x8] sm:$0xf]
    %v212 = vld [vmem:[%s3 + $0xc] sm:$0xf]
    %v213 = vld [vmem:[%s3 + $0x10] sm:$0xf]
    %v214 = vld [vmem:[%s3 + $0x14] sm:$0xf]
    %v215 = vld [vmem:[%s3 + $0x18] sm:$0xf]
    %v216 = vld [vmem:[%s3 + $0x1c] sm:$0xf]
    %v217 = vunpack.c.l.bf16 %v209
    %v218 = vunpack.c.l.bf16 %v210
    %v219 = vunpack.c.l.bf16 %v211
    %v220 = vunpack.c.l.bf16 %v212
    %v221 = vunpack.c.l.bf16 %v213
    %v222 = vunpack.c.l.bf16 %v214
    %v223 = vunpack.c.l.bf16 %v215
    %v224 = vunpack.c.l.bf16 %v216
    %v225 = vld [vmem:[%s4] sm:$0x1]
    %v227 = vlaneseq
    %v228 = vshrl.u32 %v227, 7
    %v229 = vsub.s32 0, %v228
    %v230 = vrot.slane %v225, %v229
    %v233 = vsel %vm153, %v195, 0
    %v236 = vsel %vm153, %v198, 0
    %v239 = vsel %vm153, %v203, 0
    %v242 = vsel %vm153, %v206, 0
    %244 = vmatprep.subr.mxu0 0.0
    %245 = vmatpush1.msra.mxu0 %v217
    %246 = vmatprep.subr.mxu0 0.0
    %247 = vmatpush1.msra.mxu0 %v218
    %248 = vmatprep.subr.mxu0 0.0
    %249 = vmatpush1.msra.mxu0 %v219
    %250 = vmatprep.subr.mxu0 0.0
    %251 = vmatpush1.msra.mxu0 %v220
    %252 = vmatprep.subr.mxu0 0.0
    %253 = vmatpush1.msra.mxu0 %v221
    %254 = vmatprep.subr.mxu0 0.0
    %255 = vmatpush1.msra.mxu0 %v222
    %256 = vmatprep.subr.mxu0 0.0
    %257 = vmatpush1.msra.mxu0 %v223
    %258 = vmatprep.subr.mxu0 0.0
    %259 = vmatpush1.msra.mxu0 %v224
    %260 = vmatprep.subr.mxu0 0.0
    %261 = vmatpush1.msra.mxu0 0.0
    %262 = vmatprep.subr.mxu0 0.0
    %263 = vmatpush1.msra.mxu0 0.0
    %264 = vmatprep.subr.mxu0 0.0
    %265 = vmatpush1.msra.mxu0 0.0
    %266 = vmatprep.subr.mxu0 0.0
    %267 = vmatpush1.msra.mxu0 0.0
    %268 = vmatprep.subr.mxu0 0.0
    %269 = vmatpush1.msra.mxu0 0.0
    %270 = vmatprep.subr.mxu0 0.0
    %271 = vmatpush1.msra.mxu0 0.0
    %272 = vmatprep.subr.mxu0 0.0
    %273 = vmatpush1.msra.mxu0 0.0
    %274 = vmatprep.subr.mxu0 0.0
    %275 = vmatpush1.msra.mxu0 0.0
    %276 = vmatprep.subr.mxu0 0.0
    %277 = vmatpush1.msra.mxu0 0.0
    %278 = vmatprep.subr.mxu0 0.0
    %279 = vmatpush1.msra.mxu0 0.0
    %280 = vmatprep.subr.mxu0 0.0
    %281 = vmatpush1.msra.mxu0 0.0
    %282 = vmatprep.subr.mxu0 0.0
    %283 = vmatpush1.msra.mxu0 0.0
    %284 = vmatprep.subr.mxu0 0.0
    %285 = vmatpush1.msra.mxu0 0.0
    %286 = vmatprep.subr.mxu0 0.0
    %287 = vmatpush1.msra.mxu0 0.0
    %288 = vmatprep.subr.mxu0 0.0
    %289 = vmatpush1.msra.mxu0 0.0
    %290 = vmatprep.subr.mxu0 0.0
    %291 = vmatpush1.msra.mxu0 0.0
    %292 = vmatprep.subr.mxu0 0.0
    %293 = vmatpush1.msra.mxu0 0.0
    %294 = vmatprep.subr.mxu0 0.0
    %295 = vmatpush1.msra.mxu0 0.0
    %296 = vmatprep.subr.mxu0 0.0
    %297 = vmatpush1.msra.mxu0 0.0
    %298 = vmatprep.subr.mxu0 0.0
    %299 = vmatpush1.msra.mxu0 0.0
    %300 = vmatprep.subr.mxu0 0.0
    %301 = vmatpush1.msra.mxu0 0.0
    %302 = vmatprep.subr.mxu0 0.0
    %303 = vmatpush1.msra.mxu0 0.0
    %304 = vmatprep.subr.mxu0 0.0
    %305 = vmatpush1.msra.mxu0 0.0
    %306 = vmatprep.subr.mxu0 0.0
    %307 = vmatpush1.msra.mxu0 0.0
    %308 = vmatprep.mubr.f32.mxu0 0.0
    %309 = vmatmul.mubr.f32.gmra.mrb[0].mxu0 %v233
    %v310 = vpop.f32.mrb[0].mxu0
    %v311 = vadd.f32 %v230, %v310
    %v312 = vpop.f32.mrb[0].mxu0
    %313 = vmatprep.mubr.f32.mxu0 0.0
    %314 = vmatmul.mubr.f32.gmra.mrb[0].mxu0 %v236
    %v315 = vpop.f32.mrb[0].mxu0
    %v316 = vadd.f32 %v230, %v315
    %v317 = vpop.f32.mrb[0].mxu0
    %318 = vmatprep.mubr.f32.mxu0 0.0
    %319 = vmatmul.mubr.f32.gmra.mrb[0].mxu0 %v239
    %v320 = vpop.f32.mrb[0].mxu0
    %v321 = vadd.f32 %v230, %v320
    %v322 = vpop.f32.mrb[0].mxu0
    %323 = vmatprep.mubr.f32.mxu0 0.0
    %324 = vmatmul.mubr.f32.gmra.mrb[0].mxu0 %v242
    %v325 = vpop.f32.mrb[0].mxu0
    %v326 = vadd.f32 %v230, %v325
    %v327 = vpop.f32.mrb[0].mxu0
    %328 = vdwg.mxu0
    %v329 = vld [vmem:[%s5] sm:$0x1]
    %vm332 = vcmask 1040384
    %v333 = vrot.slane %v311, 7
    %v334 = vrot.slane %v316, 7
    %v335 = vsel %vm332, %v333, %v334
    %v339 = vsel %vm332, %v329, %v333
    %v340 = vsel %vm332, %v334, 0.0
    %v341 = vld [vmem:[%s6] sm:$0xff]
    %v342 = vld [vmem:[%s6 + $0x8] sm:$0xff]
    %v343 = vld [vmem:[%s6 + $0x10] sm:$0xff]
    %v344 = vld [vmem:[%s6 + $0x18] sm:$0xff]
    %v345 = vadd.f32 %v339, %v341
    %v346 = vadd.f32 %v335, %v342
    %v347 = vadd.f32 %v340, %v343
    %v348 = vadd.f32 %v344, 0.0
    %349 = vst [vmem:[#allocation2] sm:$0xff] %v345
    %350 = vst [vmem:[#allocation2 + $0x8] sm:$0xff] %v346
    %351 = vst [vmem:[#allocation2 + $0x10] sm:$0xff] %v347
    %352 = vst [vmem:[#allocation2 + $0x18] sm:$0xff] %v348
    %v353 = vld [vmem:[%s5] sm:$0x1]
    %v356 = vrot.slane %v321, 7
    %v357 = vrot.slane %v326, 7
    %v358 = vsel %vm332, %v356, %v357
    %v362 = vsel %vm332, %v353, %v356
    %v363 = vsel %vm332, %v357, 0.0
    %v364 = vld [vmem:[%s6] sm:$0xff]
    %v365 = vld [vmem:[%s6 + $0x8] sm:$0xff]
    %v366 = vld [vmem:[%s6 + $0x10] sm:$0xff]
    %v367 = vld [vmem:[%s6 + $0x18] sm:$0xff]
    %v368 = vadd.f32 %v362, %v364
    %v369 = vadd.f32 %v358, %v365
    %v370 = vadd.f32 %v363, %v366
    %v371 = vadd.f32 %v367, 0.0
    %s372 = scalar_lea.vmem [#allocation2], 32
    %373 = vst [vmem:[%s372] sm:$0xff] %v368
    %374 = vst [vmem:[%s372 + $0x8] sm:$0xff] %v369
    %375 = vst [vmem:[%s372 + $0x10] sm:$0xff] %v370
    %376 = vst [vmem:[%s372 + $0x18] sm:$0xff] %v371
    // Predicated region
    $region30: #{tpu_custom_call.1} parent=1 // pred_check
      _
    $region31: #{tpu_custom_call.1} parent=1 // pred_check_branch
      %378 = sbr.rel (0) target = $region33
    $region32: #{tpu_custom_call.1} parent=1 // pred_region
      %s380 = ssub.s32 1024, 1024
      %381 = vsyncadd [#allocation3], %s380
      %s382 = sshll.u32 [#allocation2], 4
      %s383 = int_to_ptr.vmem [resolvable:$true] %s382
      %388 = dma.vmem_to_hbm [thread:$0]  %s383, 1024, %s7, [#allocation3], 128, 128, 8
    $region33: #{tpu_custom_call.1} parent=1 // pred_fallthru
      _
    // Predicated region
    $region34: #{tpu_custom_call.1} parent=1 // pred_check
      _
    $region35: #{tpu_custom_call.1} parent=1 // pred_check_branch
      %390 = sbr.rel (0) target = $region37
    $region36: #{tpu_custom_call.1} parent=1 // pred_region
      %391 = dma.done [#allocation3], 1024
    $region37: #{tpu_custom_call.1} parent=1 // pred_fallthru
      _
    %392 = vsyncpa [#allocation3], 1

</llo_original>
